<compile_context>
chip_gen: v6e
topology: v6e:2x2x1
jax: 0.10.0
libtpu: 0.0.40
codegen_flags: <defaults>
</compile_context>

<pallas_src>
import math
import functools

import jax
import jax.numpy as jnp
from jax.experimental import pallas as pl
from jax.experimental.pallas import tpu as pltpu


def build_pe_table(d_model: int, max_seq_len: int = 160) -> jnp.ndarray:
    """Reproduce the PyTorch __init__ loop exactly (note the asymmetric exponents:
    sin uses 2*i with i the even index, cos uses 2*(i+1) with i+1 the odd index)."""
    assert d_model % 2 == 0, "model dimension has to be multiple of 2"
    pos = jnp.arange(max_seq_len, dtype=jnp.float32)[:, None]        # (L, 1)
    i_even = jnp.arange(0, d_model, 2, dtype=jnp.float32)[None, :]   # (1, D/2)
    sin_part = jnp.sin(pos / jnp.power(10000.0, 2.0 * i_even / d_model))
    cos_part = jnp.cos(pos / jnp.power(10000.0, 2.0 * (i_even + 1.0) / d_model))
    pe = jnp.zeros((max_seq_len, d_model), dtype=jnp.float32)
    pe = pe.at[:, 0::2].set(sin_part)
    pe = pe.at[:, 1::2].set(cos_part)
    return pe  # (max_seq_len, d_model)


def _scale_add_kernel(x_ref, pe_ref, o_ref, *, scale):
    # Pure element-wise: one multiply-add per element, lane-dense load/stores.
    o_ref[...] = x_ref[...] * scale + pe_ref[...]


_TARGET_BLOCK_BYTES = 2 * 1024 * 1024  # ~2 MiB per block; ~12 MiB total with double-buffering


def _choose_tiles(n_rows: int, n_cols: int, itemsize: int):
    """Pick (row_tile, col_tile) obeying the (8,128)/full-extent rule and the VMEM budget."""
    # Lane (last-dim) tile: keep the full width unless it is 128-divisible and a
    # minimal 8-row full-width block alone would exceed the budget.
    col_tile = n_cols
    if n_cols % 128 == 0:
        max_cols = max(128, (_TARGET_BLOCK_BYTES // (8 * itemsize)) // 128 * 128)
        col_tile = min(n_cols, max_cols)
    # Sublane (row) tile: as many rows as fit the budget (multiple of 8), capped at the array.
    rows = max(8, (_TARGET_BLOCK_BYTES // (col_tile * itemsize)) // 8 * 8)
    row_tile = min(n_rows, rows)
    return int(row_tile), int(col_tile)


def positional_encoder_forward(x: jnp.ndarray, pe_table: jnp.ndarray) -> jnp.ndarray:
    """x: (seq_len, batch, d_model). Returns x * sqrt(d_model) + pe, same shape/dtype."""
    seq_len, batch, d_model = x.shape
    scale = float(math.sqrt(d_model))
    n_cols = batch * d_model

    # Free row-major view of x as a lane-dense 2-D slab.
    x2 = x.reshape(seq_len, n_cols)
    # Tiny table tiled over batch once in plain JAX (column c of the slab is feature
    # c % d_model, so jnp.tile along axis 1 lines up exactly with the flattened x).
    pe2 = jnp.tile(pe_table[:seq_len].astype(x.dtype), (1, batch))

    row_tile, col_tile = _choose_tiles(seq_len, n_cols, jnp.dtype(x.dtype).itemsize)
    grid = (pl.cdiv(seq_len, row_tile), pl.cdiv(n_cols, col_tile))

    block = pl.BlockSpec((row_tile, col_tile), lambda i, j: (i, j))
    out2 = pl.pallas_call(
        functools.partial(_scale_add_kernel, scale=scale),
        out_shape=jax.ShapeDtypeStruct((seq_len, n_cols), x.dtype),
        grid=grid,
        in_specs=[block, block],
        out_specs=block,
        compiler_params=pltpu.CompilerParams(
            dimension_semantics=("parallel", "parallel"),
        ),
    )(x2, pe2)
    return out2.reshape(seq_len, batch, d_model)


if __name__ == "__main__":
    d_model = 32
    max_seq_len = 160
    seq_len = 8
    batch = 2

    key = jax.random.PRNGKey(0)
    x = jax.random.normal(key, (seq_len, batch, d_model), dtype=jnp.float32)

    pe_table = build_pe_table(d_model, max_seq_len)

    out = jax.block_until_ready(positional_encoder_forward(x, pe_table))

    # sanity check against a pure-JAX reference of the PyTorch forward
    ref = x * math.sqrt(d_model) + pe_table[:seq_len][:, None, :]
    assert out.shape == (seq_len, batch, d_model)
    assert jnp.allclose(out, ref, atol=1e-5, rtol=1e-5)

    print("KERNEL_OK")
</pallas_src>

<mosaic_0001>
module attributes {stable_mosaic.version = 11 : i64} {
  func.func @_scale_add_kernel(%arg0: i32, %arg1: i32, %arg2: memref<8x64xf32, #tpu.memory_space<vmem>>, %arg3: memref<8x64xf32, #tpu.memory_space<vmem>>, %arg4: memref<8x64xf32, #tpu.memory_space<vmem>>) attributes {dimension_semantics = [#tpu.dimension_semantics<parallel>, #tpu.dimension_semantics<parallel>], iteration_bounds = array<i64: 1, 1>, scalar_prefetch = 0 : i64, scratch_operands = 0 : i64, tpu.core_type = #tpu.core_type<tc>, window_params = [{transform_indices = @transform_0, window_bounds = array<i64: 8, 64>}, {transform_indices = @transform_1, window_bounds = array<i64: 8, 64>}, {transform_indices = @transform_2, window_bounds = array<i64: 8, 64>}]} {
    %c0 = arith.constant 0 : index
    %c0_0 = arith.constant 0 : index
    %0 = vector.load %arg2[%c0, %c0_0] : memref<8x64xf32, #tpu.memory_space<vmem>>, vector<8x64xf32>
    %cst = arith.constant 5.65685415 : f32
    %1 = vector.broadcast %cst : f32 to vector<8x64xf32>
    %2 = arith.mulf %0, %1 : vector<8x64xf32>
    %c0_1 = arith.constant 0 : index
    %c0_2 = arith.constant 0 : index
    %3 = vector.load %arg3[%c0_1, %c0_2] : memref<8x64xf32, #tpu.memory_space<vmem>>, vector<8x64xf32>
    %4 = arith.addf %2, %3 : vector<8x64xf32>
    %c0_3 = arith.constant 0 : index
    %c0_4 = arith.constant 0 : index
    %5 = vector.load %arg4[%c0_3, %c0_4] : memref<8x64xf32, #tpu.memory_space<vmem>>, vector<8x64xf32>
    tpu.vector_store %arg4[%c0_3, %c0_4], %4 {strides = array<i32>} : memref<8x64xf32, #tpu.memory_space<vmem>>, vector<8x64xf32>,
    return
  }
  func.func @transform_0(%arg0: i32, %arg1: i32) -> (i32, i32) {
    %c0_i32 = arith.constant 0 : i32
    return %arg0, %arg1 : i32, i32
  }
  func.func @transform_1(%arg0: i32, %arg1: i32) -> (i32, i32) {
    %c0_i32 = arith.constant 0 : i32
    return %arg0, %arg1 : i32, i32
  }
  func.func @transform_2(%arg0: i32, %arg1: i32) -> (i32, i32) {
    %c0_i32 = arith.constant 0 : i32
    return %arg0, %arg1 : i32, i32
  }
}

</mosaic_0001>

<llo_original>
// kernel: tpu_custom_call.1
$region0: #{tpu_custom_call.1}
  #allocation0 [shape = 'u32[]', space=smem, size = 0x4, offset = 0x4, fixed_abs, tag = 'smem constant byte address 0x4 - core index']
  #allocation1 [shape = 'u32[144,128]{1,0:T(1,128)}', space=vmem, size = 0x12000, scoped, tag = 'internal scratch']
  %s0 = inlined_call_operand.hbm [shape: f32[8,64], index: 0, kind: input, shape index: {}]
  %s1 = inlined_call_operand.hbm [shape: f32[8,64], index: 1, kind: input, shape index: {}]
  %s2 = inlined_call_operand.hbm [shape: f32[8,64], index: 2, kind: output, shape index: {}]
  %s3 = sld [smem:[#allocation0]]
  $region26: #{tpu_custom_call.1} parent=0
    _
  %s5 = ssub.s32 1, %s3
  %s6 = scalar_select 0, %s5, %s3
  $region1: #{tpu_custom_call.1} parent=0
    #allocation2 [shape = 'u8[4096]{0}', space=vmem, size = 0x1000, scoped, tag = 'input window, operand 0, single buffered']
    #allocation3 [shape = 's32[1]{0}', space=sflag, size = 0x4, scoped, tag = 'scoped memory for tpu_custom_call.1']
    #allocation4 [shape = 's32[1]{0}', space=sflag, size = 0x4, scoped, tag = 'scoped memory for tpu_custom_call.1']
    #allocation5 [shape = 'u8[4096]{0}', space=vmem, size = 0x1000, scoped, tag = 'input window, operand 1, single buffered']
    #allocation6 [shape = 's32[1]{0}', space=sflag, size = 0x4, scoped, tag = 'scoped memory for tpu_custom_call.1']
    #allocation7 [shape = 'u8[4096]{0}', space=vmem, size = 0x1000, scoped, tag = 'output window, operand 0, single buffered']
    %7 = vsyncpa [#allocation3], 0
    %8 = vsyncpa [#allocation6], 0
    %9 = vsyncpa [#allocation4], 0
    // Predicated region
    $region2: #{tpu_custom_call.1} parent=1 // pred_check
      _
    $region3: #{tpu_custom_call.1} parent=1 // pred_check_branch
      %11 = sbr.rel (0) target = $region5
    $region4: #{tpu_custom_call.1} parent=1 // pred_region
      %s13 = ssub.s32 128, 128
      %14 = vsyncadd [#allocation3], %s13
      %s16 = sshll.u32 [#allocation2], 4
      %s17 = int_to_ptr.vmem [resolvable:$true] %s16
      %19 = dma.hbm_to_vmem [thread:$0]  %s0, 128, %s17, [#allocation3]
    $region5: #{tpu_custom_call.1} parent=1 // pred_fallthru
      _
    // Predicated region
    $region6: #{tpu_custom_call.1} parent=1 // pred_check
      _
    $region7: #{tpu_custom_call.1} parent=1 // pred_check_branch
      %21 = sbr.rel (0) target = $region9
    $region8: #{tpu_custom_call.1} parent=1 // pred_region
      %s23 = ssub.s32 128, 128
      %24 = vsyncadd [#allocation6], %s23
      %s26 = sshll.u32 [#allocation5], 4
      %s27 = int_to_ptr.vmem [resolvable:$true] %s26
      %29 = dma.hbm_to_vmem [thread:$0]  %s1, 128, %s27, [#allocation6]
    $region9: #{tpu_custom_call.1} parent=1 // pred_fallthru
      _
    // Predicated region
    $region10: #{tpu_custom_call.1} parent=1 // pred_check
      _
    $region11: #{tpu_custom_call.1} parent=1 // pred_check_branch
      %31 = sbr.rel (0) target = $region13
    $region12: #{tpu_custom_call.1} parent=1 // pred_region
      %32 = dma.done [#allocation3], 128
    $region13: #{tpu_custom_call.1} parent=1 // pred_fallthru
      _
    // Predicated region
    $region14: #{tpu_custom_call.1} parent=1 // pred_check
      _
    $region15: #{tpu_custom_call.1} parent=1 // pred_check_branch
      %34 = sbr.rel (0) target = $region17
    $region16: #{tpu_custom_call.1} parent=1 // pred_region
      %35 = dma.done [#allocation6], 128
    $region17: #{tpu_custom_call.1} parent=1 // pred_fallthru
      _
    %v36 = vld [vmem:[#allocation2] sm:$0xff]
    %v37 = vmul.f32 %v36, 5.656854
    %v38 = vld [vmem:[#allocation5] sm:$0xff]
    %v39 = vadd.f32 %v37, %v38
    %vm40 = vcmask 523264
    %41 = vst.msk [vmem:[#allocation7] sm:$0xff] %vm40, %v39
    // Predicated region
    $region18: #{tpu_custom_call.1} parent=1 // pred_check
      _
    $region19: #{tpu_custom_call.1} parent=1 // pred_check_branch
      %43 = sbr.rel (0) target = $region21
    $region20: #{tpu_custom_call.1} parent=1 // pred_region
      %s45 = ssub.s32 128, 128
      %46 = vsyncadd [#allocation4], %s45
      %s48 = sshll.u32 [#allocation7], 4
      %s49 = int_to_ptr.vmem [resolvable:$true] %s48
      %51 = dma.vmem_to_hbm [thread:$0]  %s49, 128, %s2, [#allocation4]
    $region21: #{tpu_custom_call.1} parent=1 // pred_fallthru
      _
    // Predicated region
    $region22: #{tpu_custom_call.1} parent=1 // pred_check
      _
    $region23: #{tpu_custom_call.1} parent=1 // pred_check_branch
      %53 = sbr.rel (0) target = $region25
    $region24: #{tpu_custom_call.1} parent=1 // pred_region
      %54 = dma.done [#allocation4], 128
    $region25: #{tpu_custom_call.1} parent=1 // pred_fallthru
      _
    %55 = vsyncpa [#allocation3], 1
    %56 = vsyncpa [#allocation6], 1
    %57 = vsyncpa [#allocation4], 1

</llo_original>
